<compile_context>
chip_gen: v5e
topology: v5e:2x2
jax: 0.10.0
libtpu: 0.0.40
codegen_flags: <defaults>
</compile_context>

<pallas_src>
import functools
import math

import jax
import jax.numpy as jnp
from jax.experimental import pallas as pl
from jax.experimental.pallas import tpu as pltpu


def _round_up(x: int, m: int) -> int:
    return ((x + m - 1) // m) * m


# ----------------------------- glue: pos embed ----------------------------- #
def sincos_pos_embed(h: int, w: int, embed_dim: int, cls_token: bool = False):
    """Replicates SinCosPosEmbed.forward exactly (plain JAX, tiny, deterministic)."""
    assert embed_dim % 2 == 0

    def _get_1d(dim, pos):
        omega = jnp.arange(dim // 2, dtype=jnp.float32) / (dim / 2.0)
        omega = 1.0 / (10000.0 ** omega)
        pos = pos.reshape(-1)
        out = jnp.einsum("m,d->md", pos, omega)
        return jnp.concatenate([jnp.sin(out), jnp.cos(out)], axis=1)

    grid_h = jnp.arange(h, dtype=jnp.float32)
    grid_w = jnp.arange(w, dtype=jnp.float32)
    gw, gh = jnp.meshgrid(grid_w, grid_h, indexing="xy")  # same axis order as torch 'xy'
    grid = jnp.stack([gw, gh], axis=0).reshape(2, 1, h, w)
    emb_h = _get_1d(embed_dim // 2, grid[0])
    emb_w = _get_1d(embed_dim // 2, grid[1])
    pos = jnp.concatenate([emb_h, emb_w], axis=1)  # (h*w, embed_dim)
    if cls_token:
        pos = jnp.concatenate([jnp.zeros((1, embed_dim), jnp.float32), pos], axis=0)
    return pos


_POS_CACHE = {}


def _pos_embed_cached(gh: int, gw: int, d: int):
    key = (gh, gw, d)
    if key not in _POS_CACHE:
        # Computed eagerly on concrete ints -> concrete array, safe to cache across jits.
        _POS_CACHE[key] = sincos_pos_embed(gh, gw, d, cls_token=False)
    return _POS_CACHE[key]


# ------------------------------ Pallas kernel ------------------------------ #
def _vit_preproc_kernel(x_ref, w_ref, posb_ref, out_ref):
    # x_ref:    (TM, Kp) bf16  patch rows (flattened batch*token tile)
    # w_ref:    (Kp, D)  bf16  projection weight (constant block -> fetched once)
    # posb_ref: (TM, D)  f32   pos-embed + conv bias (folded on the host)
    # out_ref:  (TM, D)  out_dtype
    y = jnp.dot(x_ref[...], w_ref[...], preferred_element_type=jnp.float32)  # MXU, f32 acc
    out_ref[...] = (y + posb_ref[...]).astype(out_ref.dtype)


# ------------------------------ tiling policy ------------------------------ #
def _choose_tiling(B, N, Kp, D, out_itemsize, tm_target, vmem_budget):
    """Returns (Np, TM, k, T, G): per-batch padded rows, tile rows, batches-per-tile,
    tiles-per-(batch-group), number of groups.  Grid will be (T, G)."""
    Np = _round_up(N, 16)  # bf16 sublane packing on the row axis (>=8 for f32)

    # Cap tile rows so double-buffered x/posb/out tiles + weight fit the v7x VMEM budget.
    per_row = 2 * (Kp * 2 + D * 4 + D * out_itemsize)
    w_bytes = 2 * Kp * D * 2
    tm_cap = max(16, ((vmem_budget - w_bytes) // per_row) // 16 * 16)
    tm_target = max(16, min(tm_target, tm_cap))

    if Np <= tm_target:
        # One tile spans k whole batches (k | B). posb is host-tiled to TM rows so its
        # block index is constant across the grid (DMA'd once, then revisited).
        k = 1
        for cand in range(max(1, min(B, tm_target // Np)), 0, -1):
            if B % cand == 0 and (B // cand >= 2 or cand == 1):
                k = cand
                break
        TM, T, G = k * Np, 1, B // k
    else:
        # Tile within a batch; prefer MXU-friendly multiples of 256, fall back to 16.
        k = 1
        TM = None
        for step in (256, 16):
            cand = (tm_target // step) * step
            while cand >= step:
                if Np % cand == 0:
                    TM = cand
                    break
                cand -= step
            if TM is not None:
                break
        if TM is None:  # unreachable (Np is a multiple of 16), kept for safety
            TM = 16
        T, G = Np // TM, B

    # Guarantee >= 2 grid steps where possible so both v7x TensorCores get work.
    if T * G < 2 and k == 1 and Np >= 32 and Np % 32 == 0:
        TM, T = Np // 2, 2
    return Np, TM, k, T, G


# ---------------------------------- wrapper --------------------------------- #
def vit_preprocessor(data, weight, bias, patch_size, *,
                     out_dtype=jnp.float32, tm_target: int = 1024,
                     vmem_budget: int = 40 * 1024 * 1024):
    """data: (B, C, H, W) f32. weight: (D, C, ph, pw). bias: (D,). Returns (B, N, D)."""
    B, C, H, W = data.shape
    ph, pw = patch_size
    assert H % ph == 0 and W % pw == 0, "image size must be divisible by patch size"
    gh, gw = H // ph, W // pw
    N = gh * gw
    D = weight.shape[0]
    K = C * ph * pw

    Kp = _round_up(K, 128)  # lane-dense contraction dim (no-op for real ViT dims)
    out_itemsize = jnp.dtype(out_dtype).itemsize
    Np, TM, k, T, G = _choose_tiling(B, N, Kp, D, out_itemsize, tm_target, vmem_budget)
    M = B * Np

    # Patch extraction (im2col) in (c, kh, kw) order matching Conv2d weight (D,C,ph,pw).
    # allow_input_fusion lets XLA fuse this producer into the pallas operand so the
    # (M, Kp) bf16 copy is never materialized in HBM.
    x = data.reshape(B, C, gh, ph, gw, pw)
    x = jnp.transpose(x, (0, 2, 4, 1, 3, 5)).reshape(B, N, K).astype(jnp.bfloat16)
    x = jnp.pad(x, ((0, 0), (0, Np - N), (0, Kp - K)))
    patches = x.reshape(M, Kp)                                   # (M, Kp) bf16

    # Projection weight as (Kp, D) bf16 (D stays un-padded: full-dim block).
    w_mat = weight.reshape(D, K).T.astype(jnp.bfloat16)
    w_mat = jnp.pad(w_mat, ((0, Kp - K), (0, 0)))

    # Fold conv bias into the pos-embed table (one fewer VPU add / DMA stream).
    posb = _pos_embed_cached(gh, gw, D) + bias.astype(jnp.float32)[None, :]
    posb = jnp.pad(posb, ((0, Np - N), (0, 0)))                  # (Np, D) f32
    if k > 1:
        posb = jnp.tile(posb, (k, 1))                            # (TM, D): constant block

    cost = pl.CostEstimate(
        flops=2 * M * Kp * D,
        transcendentals=0,
        bytes_accessed=M * Kp * 2 + Kp * D * 2 + posb.size * 4 + M * D * out_itemsize,
    )

    out = pl.pallas_call(
        _vit_preproc_kernel,
        out_shape=jax.ShapeDtypeStruct((M, D), out_dtype),
        grid=(T, G),                                             # batch(-group) axis innermost
        in_specs=[
            pl.BlockSpec((TM, Kp), lambda t, g: (g * T + t, 0)),  # patch tile
            # Constant index_map -> fetched once and revisited thereafter.
            # TODO(synk): pipeline_mode=pl.Buffered(1) would also drop its 2nd VMEM buffer.
            pl.BlockSpec((Kp, D), lambda t, g: (0, 0)),           # weight
            pl.BlockSpec((TM, D), lambda t, g: (t, 0)),           # pos+bias, revisited over g
        ],
        out_specs=pl.BlockSpec((TM, D), lambda t, g: (g * T + t, 0)),
        compiler_params=pltpu.CompilerParams(
            dimension_semantics=("parallel", "parallel"),
            vmem_limit_bytes=48 * 1024 * 1024,
            allow_input_fusion=[True, False, False],
        ),
        cost_estimate=cost,
    )(patches, w_mat, posb)

    out = out.reshape(B, Np, D)
    if Np != N:
        # TODO(synk): for N % 16 != 0 this slice should fuse into the downstream consumer;
        # writing the exact ragged (B, N, D) directly would need per-batch boundary masking.
        out = out[:, :N]
    return out
    # TODO(synk): drop_patches path (boolean-mask gather, runtime-variable token count) is
    # data-dependent ragged indexing; not implemented (module default is False).
    # TODO(synk): cls_token concat not implemented (module default is False).


# ---------------------------------- main ----------------------------------- #
if __name__ == "__main__":
    # Small config consistent with the module: img=16, patch=4, in_chans=4, embed_dim=32
    B, C, H, W = 2, 4, 16, 16
    ph = pw = 4
    D = 32
    K = C * ph * pw

    key = jax.random.PRNGKey(0)
    k_data, k_w, k_b = jax.random.split(key, 3)

    data = jax.random.normal(k_data, (B, C, H, W), dtype=jnp.float32)

    # Deterministic params:
    #  - conv weight: xavier_uniform on the (D, K) view (as in initialize_weights)
    bound = math.sqrt(6.0 / (D + K))
    weight = jax.random.uniform(k_w, (D, C, ph, pw), jnp.float32, -bound, bound)
    #  - conv bias: uniform(-1/sqrt(fan_in), 1/sqrt(fan_in)), fan_in = C*ph*pw (Conv2d default)
    b_bound = 1.0 / math.sqrt(K)
    bias = jax.random.uniform(k_b, (D,), jnp.float32, -b_bound, b_bound)

    fn = jax.jit(functools.partial(vit_preprocessor, patch_size=(ph, pw)))
    out = jax.block_until_ready(fn(data, weight, bias))

    # Reference of the same math (bf16-rounded operands, f32 accumulation) in plain JAX.
    x = data.reshape(B, C, H // ph, ph, W // pw, pw)
    x = jnp.transpose(x, (0, 2, 4, 1, 3, 5)).reshape(B, -1, K)
    xb = x.astype(jnp.bfloat16).astype(jnp.float32)
    wb = weight.reshape(D, K).T.astype(jnp.bfloat16).astype(jnp.float32)
    ref = jnp.einsum("bnk,kd->bnd", xb, wb, precision=jax.lax.Precision.HIGHEST)
    ref = ref + bias[None, None, :] + sincos_pos_embed(H // ph, W // pw, D)[None]

    assert out.shape == (B, (H // ph) * (W // pw), D)
    assert jnp.allclose(out, ref, atol=1e-3, rtol=1e-3), float(jnp.max(jnp.abs(out - ref)))

    print("KERNEL_OK")
</pallas_src>

<mosaic_0001>
module attributes {stable_mosaic.version = 11 : i64} {
  func.func @_vit_preproc_kernel(%arg0: i32, %arg1: i32, %arg2: memref<16x128xbf16, #tpu.memory_space<vmem>>, %arg3: memref<128x32xbf16, #tpu.memory_space<vmem>>, %arg4: memref<16x32xf32, #tpu.memory_space<vmem>>, %arg5: memref<16x32xf32, #tpu.memory_space<vmem>>) attributes {dimension_semantics = [#tpu.dimension_semantics<parallel>, #tpu.dimension_semantics<parallel>], iteration_bounds = array<i64: 1, 2>, scalar_prefetch = 0 : i64, scratch_operands = 0 : i64, tpu.core_type = #tpu.core_type<tc>, window_params = [{transform_indices = @transform_0, window_bounds = array<i64: 16, 128>}, {pipeline_mode = #tpu.pipeline_mode<synchronous>, transform_indices = @transform_1, window_bounds = array<i64: 128, 32>}, {transform_indices = @transform_2, window_bounds = array<i64: 16, 32>}, {transform_indices = @transform_3, window_bounds = array<i64: 16, 32>}]} {
    %c0 = arith.constant 0 : index
    %c0_0 = arith.constant 0 : index
    %0 = vector.load %arg2[%c0, %c0_0] : memref<16x128xbf16, #tpu.memory_space<vmem>>, vector<16x128xbf16>
    %c0_1 = arith.constant 0 : index
    %c0_2 = arith.constant 0 : index
    %1 = vector.load %arg3[%c0_1, %c0_2] : memref<128x32xbf16, #tpu.memory_space<vmem>>, vector<128x32xbf16>
    %cst = arith.constant dense<0.000000e+00> : vector<16x32xf32>
    %2 = tpu.matmul %0, %1, %cst {dimension_numbers = #tpu.dot_dimension_numbers<[1], [0], [0], [1], [0, 0, 1, 1], [], []>} : vector<16x128xbf16>, vector<128x32xbf16>, vector<16x32xf32> -> vector<16x32xf32>
    %c0_3 = arith.constant 0 : index
    %c0_4 = arith.constant 0 : index
    %3 = vector.load %arg4[%c0_3, %c0_4] : memref<16x32xf32, #tpu.memory_space<vmem>>, vector<16x32xf32>
    %4 = arith.addf %2, %3 : vector<16x32xf32>
    %c0_5 = arith.constant 0 : index
    %c0_6 = arith.constant 0 : index
    %5 = vector.load %arg5[%c0_5, %c0_6] : memref<16x32xf32, #tpu.memory_space<vmem>>, vector<16x32xf32>
    tpu.vector_store %arg5[%c0_5, %c0_6], %4 {strides = array<i32>} : memref<16x32xf32, #tpu.memory_space<vmem>>, vector<16x32xf32>,
    return
  }
  func.func @transform_0(%arg0: i32, %arg1: i32) -> (i32, i32) {
    %c1_i32 = arith.constant 1 : i32
    %0 = arith.muli %arg1, %c1_i32 : i32
    %1 = arith.addi %0, %arg0 : i32
    %c0_i32 = arith.constant 0 : i32
    %c0_i32_0 = arith.constant 0 : i32
    return %1, %c0_i32 : i32, i32
  }
  func.func @transform_1(%arg0: i32, %arg1: i32) -> (i32, i32) {
    %c0_i32 = arith.constant 0 : i32
    %c0_i32_0 = arith.constant 0 : i32
    %c0_i32_1 = arith.constant 0 : i32
    return %c0_i32, %c0_i32_0 : i32, i32
  }
  func.func @transform_2(%arg0: i32, %arg1: i32) -> (i32, i32) {
    %c0_i32 = arith.constant 0 : i32
    %c0_i32_0 = arith.constant 0 : i32
    return %arg0, %c0_i32 : i32, i32
  }
  func.func @transform_3(%arg0: i32, %arg1: i32) -> (i32, i32) {
    %c1_i32 = arith.constant 1 : i32
    %0 = arith.muli %arg1, %c1_i32 : i32
    %1 = arith.addi %0, %arg0 : i32
    %c0_i32 = arith.constant 0 : i32
    %c0_i32_0 = arith.constant 0 : i32
    return %1, %c0_i32 : i32, i32
  }
}

</mosaic_0001>

<llo_original>
// kernel: squeeze.2
$region0: #{squeeze.2}
  %s0 = inlined_call_operand.vmem [shape: f32[1,4,4], index: 0, kind: input, shape index: {}]
  %s1 = inlined_call_operand.vmem [shape: f32[16], index: 1, kind: output, shape index: {}]
  $region1: #{squeeze.2} parent=0
    #allocation0 [shape = 'u8[4096]{0}', space=vmem, size = 0x1000, scoped, tag = 'scoped mem for output reshape']
    #allocation1 [shape = 'u8[4096]{0}', space=vmem, size = 0x1000, scoped, tag = 'scoped mem for input reshape']
    %s3 = ssub.s32 16, 1
    %v4 = vld [vmem:[%s0] sm:%s3]
    %5 = vst [vmem:[#allocation1] sm:%s3] %v4
    %v6 = vld [vmem:[#allocation1] sm:$0x1]
    %vm7 = vcmask 31744
    %8 = vst.msk [vmem:[#allocation0] sm:$0x1] %vm7, %v6
    %s9 = scalar_lea.vmem [#allocation1], 3
    %v10 = vld [vmem:[%s9] sm:$0x1]
    %11 = vrot.lane.b32.xlu0 %v10, 12
    %v12 = vpop.permute.xlu0 %11
    %vm13 = vcmask 130144
    %14 = vst.msk [vmem:[#allocation0] sm:$0x1] %vm13, %v12
    %s15 = scalar_lea.vmem [#allocation1], 2
    %v16 = vld [vmem:[%s15] sm:$0x1]
    %17 = vrot.lane.b32.xlu0 %v16, 8
    %v18 = vpop.permute.xlu0 %17
    %vm19 = vcmask 97344
    %20 = vst.msk [vmem:[#allocation0] sm:$0x1] %vm19, %v18
    %s21 = scalar_lea.vmem [#allocation1], 1
    %v22 = vld [vmem:[%s21] sm:$0x1]
    %23 = vrot.lane.b32.xlu0 %v22, 4
    %v24 = vpop.permute.xlu0 %23
    %vm25 = vcmask 64544
    %26 = vst.msk [vmem:[#allocation0] sm:$0x1] %vm25, %v24
    %s28 = ssub.s32 2, 1
    %v29 = vld [vmem:[#allocation0] sm:%s28]
    %s31 = ssub.s32 2, 1
    %32 = vst [vmem:[%s1] sm:%s31] %v29

// kernel: squeeze.3
$region0: #{squeeze.3}
  %s0 = inlined_call_operand.vmem [shape: f32[1,1,4,4], index: 0, kind: input, shape index: {}]
  %s1 = inlined_call_operand.vmem [shape: f32[16], index: 1, kind: output, shape index: {}]
  $region1: #{squeeze.3} parent=0
    #allocation0 [shape = 'u8[4096]{0}', space=vmem, size = 0x1000, scoped, tag = 'scoped mem for output reshape']
    #allocation1 [shape = 'u8[4096]{0}', space=vmem, size = 0x1000, scoped, tag = 'scoped mem for input reshape']
    %s3 = ssub.s32 16, 1
    %v4 = vld [vmem:[%s0] sm:%s3]
    %5 = vst [vmem:[#allocation1] sm:%s3] %v4
    %v6 = vld [vmem:[#allocation1] sm:$0x1]
    %vm7 = vcmask 31744
    %8 = vst.msk [vmem:[#allocation0] sm:$0x1] %vm7, %v6
    %s9 = scalar_lea.vmem [#allocation1], 3
    %v10 = vld [vmem:[%s9] sm:$0x1]
    %11 = vrot.lane.b32.xlu0 %v10, 12
    %v12 = vpop.permute.xlu0 %11
    %vm13 = vcmask 130144
    %14 = vst.msk [vmem:[#allocation0] sm:$0x1] %vm13, %v12
    %s15 = scalar_lea.vmem [#allocation1], 2
    %v16 = vld [vmem:[%s15] sm:$0x1]
    %17 = vrot.lane.b32.xlu0 %v16, 8
    %v18 = vpop.permute.xlu0 %17
    %vm19 = vcmask 97344
    %20 = vst.msk [vmem:[#allocation0] sm:$0x1] %vm19, %v18
    %s21 = scalar_lea.vmem [#allocation1], 1
    %v22 = vld [vmem:[%s21] sm:$0x1]
    %23 = vrot.lane.b32.xlu0 %v22, 4
    %v24 = vpop.permute.xlu0 %23
    %vm25 = vcmask 64544
    %26 = vst.msk [vmem:[#allocation0] sm:$0x1] %vm25, %v24
    %s28 = ssub.s32 2, 1
    %v29 = vld [vmem:[#allocation0] sm:%s28]
    %s31 = ssub.s32 2, 1
    %32 = vst [vmem:[%s1] sm:%s31] %v29

// kernel: vit_preprocessor.1
$region0: #{vit_preprocessor.1}
  #allocation0 [shape = 'u32[]', space=smem, size = 0x4, offset = 0x4, fixed_abs, tag = 'smem constant byte address 0x4 - core index']
  #allocation1 [shape = 'u32[72,128]{1,0:T(1,128)}', space=vmem, size = 0x9000, scoped, tag = 'internal scratch']
  %s0 = inlined_call_operand.vmem [shape: bf16[32,128], index: 0, kind: input, shape index: {}]
  %s1 = inlined_call_operand.vmem [shape: bf16[128,32], index: 1, kind: input, shape index: {}]
  %s2 = inlined_call_operand.vmem [shape: f32[16,32], index: 2, kind: input, shape index: {}]
  %s3 = inlined_call_operand.hbm [shape: f32[32,32], index: 3, kind: output, shape index: {}]
  %s4 = sld [smem:[#allocation0]]
  $region45: #{vit_preprocessor.1} parent=0
    _
  %s6 = ssub.s32 1, %s4
  %s7 = scalar_select 0, %s6, %s4
  $region1: #{vit_preprocessor.1} parent=0
    #allocation2 [shape = 'u8[16384]{0}', space=vmem, size = 0x4000, scoped, tag = 'output window, operand 0']
    #allocation3 [shape = 's32[2]{0}', space=sflag, size = 0x8, scoped, tag = 'scoped memory for vit_preprocessor.1']
    %8 = vsyncpa [#allocation3], 0
    %s9 = scalar_lea.sflag [#allocation3], 1
    %10 = vsyncpa %s9, 0
    loop: start=0, step=1, limit=4
    $region2: #{vit_preprocessor.1} parent=1 // loop_pre_header
      _
    $region3: #{vit_preprocessor.1} parent=1 // loop_header
      %s12 = sphi 0, %s16
      %p13 = scmp.ge.s32.totalorder %s12, 4
      %s19 = sphi 0, %s31
      %s20 = sphi 0, %s27
      %s21 = sphi 0, %s19
      %s22 = sphi 0, %s20
      %s23 = sphi 0, %s21
      %s24 = sphi 0, %s22
      %s36 = sphi 0, %s38
      %s39 = sphi 0, %s36
      %s40 = sphi 0, %s39
      %s56 = sphi 0, %s40
      %s60 = sphi 0, %s60
      %s62 = sphi 0, %s60
      %s63 = sphi 0, %s62
      %s77 = sphi 0, %s63
      %s83 = sphi 0, %s85
      %s86 = sphi 0, %s83
      %s87 = sphi 0, %s86
      %s103 = sphi 0, %s87
      %s111 = sphi 0, %s113
      %s114 = sphi 0, %s111
      %s115 = sphi 0, %s114
      %s131 = sphi 0, %s115
    $region4: #{vit_preprocessor.1} parent=1 // loop_header_branch
      %15 = sbr.rel (%p13) target = $region8
    $region5: #{vit_preprocessor.1} parent=1 // loop_body
      %s17 = ssub.s32 %s12, 1
      %s18 = ssub.s32 %s12, 2
      %s25 = sadd.s32 1, %s20
      %p26 = scmp.ge.s32.totalorder %s25, 2
      %s27 = scalar_select %p26, 0, %s25
      %s28 = sadd.s32 1, %s19
      %s29 = scalar_select %p26, %s28, %s19
      %p30 = scmp.ge.s32.totalorder %s29, 1
      %s31 = scalar_select %p30, 0, %s29
      %s32 = sadd.s32 %s20, %s19
      %s33 = sadd.s32 %s27, %s31
      %s34 = ssub.s32 %s32, %s33
      %p35 = scmp.eq.s32.totalorder %s34, 0
      %s37 = sadd.s32 %s36, 1
      %s38 = scalar_select %p35, %s36, %s37
      %p41 = pneg %p35
      %p42 = scmp.eq.s32.totalorder %s12, 1
      %p43 = por %p41, %p42
      %p44 = scmp.ne.s32.totalorder %s36, %s39
      %p45 = scmp.eq.s32.totalorder %s12, 0
      %p46 = por %p44, %p45
      %p47 = scmp.ne.s32.totalorder %s36, %s39
      %p48 = scmp.eq.s32.totalorder %s17, 1
      %p49 = por %p47, %p48
      %p50 = scmp.ne.s32.totalorder %s39, %s40
      %p51 = scmp.eq.s32.totalorder %s17, 0
      %p52 = por %p50, %p51
      %p53 = scmp.ne.s32.totalorder %s39, %s40
      %p54 = scmp.eq.s32.totalorder %s18, 1
      %p55 = por %p53, %p54
      %p57 = scmp.ne.s32.totalorder %s40, %s56
      %p58 = scmp.eq.s32.totalorder %s18, 0
      %p59 = por %p57, %p58
      %s61 = sadd.s32 %s60, 1
      %p64 = scmp.eq.s32.totalorder %s12, 1
      %p65 = scmp.ne.s32.totalorder %s60, %s62
      %p66 = scmp.eq.s32.totalorder %s12, 0
      %p67 = por %p65, %p66
      %p68 = scmp.ne.s32.totalorder %s60, %s62
      %p69 = scmp.eq.s32.totalorder %s17, 1
      %p70 = por %p68, %p69
      %p71 = scmp.ne.s32.totalorder %s62, %s63
      %p72 = scmp.eq.s32.totalorder %s17, 0
      %p73 = por %p71, %p72
      %p74 = scmp.ne.s32.totalorder %s62, %s63
      %p75 = scmp.eq.s32.totalorder %s18, 1
      %p76 = por %p74, %p75
      %p78 = scmp.ne.s32.totalorder %s63, %s77
      %p79 = scmp.eq.s32.totalorder %s18, 0
      %p80 = por %p78, %p79
      %s81 = ssub.s32 %s19, %s31
      %p82 = scmp.eq.s32.totalorder %s81, 0
      %s84 = sadd.s32 %s83, 1
      %s85 = scalar_select %p82, %s83, %s84
      %p88 = pneg %p82
      %p89 = scmp.eq.s32.totalorder %s12, 1
      %p90 = por %p88, %p89
      %p91 = scmp.ne.s32.totalorder %s83, %s86
      %p92 = scmp.eq.s32.totalorder %s12, 0
      %p93 = por %p91, %p92
      %p94 = scmp.ne.s32.totalorder %s83, %s86
      %p95 = scmp.eq.s32.totalorder %s17, 1
      %p96 = por %p94, %p95
      %p97 = scmp.ne.s32.totalorder %s86, %s87
      %p98 = scmp.eq.s32.totalorder %s17, 0
      %p99 = por %p97, %p98
      %p100 = scmp.ne.s32.totalorder %s86, %s87
      %p101 = scmp.eq.s32.totalorder %s18, 1
      %p102 = por %p100, %p101
      %p104 = scmp.ne.s32.totalorder %s87, %s103
      %p105 = scmp.eq.s32.totalorder %s18, 0
      %p106 = por %p104, %p105
      %s107 = sadd.s32 %s20, %s19
      %s108 = sadd.s32 %s27, %s31
      %s109 = ssub.s32 %s107, %s108
      %p110 = scmp.eq.s32.totalorder %s109, 0
      %s112 = sadd.s32 %s111, 1
      %s113 = scalar_select %p110, %s111, %s112
      %p116 = pneg %p110
      %p117 = scmp.eq.s32.totalorder %s12, 1
      %p118 = por %p116, %p117
      %p119 = scmp.ne.s32.totalorder %s111, %s114
      %p120 = scmp.eq.s32.totalorder %s12, 0
      %p121 = por %p119, %p120
      %p122 = scmp.ne.s32.totalorder %s111, %s114
      %p123 = scmp.eq.s32.totalorder %s17, 1
      %p124 = por %p122, %p123
      %p125 = scmp.ne.s32.totalorder %s114, %s115
      %p126 = scmp.eq.s32.totalorder %s17, 0
      %p127 = por %p125, %p126
      %p128 = scmp.ne.s32.totalorder %s114, %s115
      %p129 = scmp.eq.s32.totalorder %s18, 1
      %p130 = por %p128, %p129
      %p132 = scmp.ne.s32.totalorder %s115, %s131
      %p133 = scmp.eq.s32.totalorder %s18, 0
      %p134 = por %p132, %p133
      %p135 = scmp.le.s32.totalorder 1, %s12
      %p136 = scmp.lt.s32.totalorder %s12, 3
      %p137 = pnand %p135, %p136
      %p138 = pneg %p137
      // Predicated region
      $region9: #{vit_preprocessor.1} parent=5 // pred_check
        _
      $region10: #{vit_preprocessor.1} parent=5 // pred_check_branch
        %140 = sbr.rel (%p137) target = $region12
      $region11: #{vit_preprocessor.1} parent=5 // pred_region
        %s141 = ssub.s32 %s12, 1
        // Predicated region
        $region13: #{vit_preprocessor.1} parent=11 // pred_check
          %p142 = pneg %p73
        $region14: #{vit_preprocessor.1} parent=11 // pred_check_branch
          %144 = sbr.rel (%p142) target = $region16
        $region15: #{vit_preprocessor.1} parent=11 // pred_region
          _
        $region16: #{vit_preprocessor.1} parent=11 // pred_fallthru
          _
        // Predicated region
        $region17: #{vit_preprocessor.1} parent=11 // pred_check
          %p145 = pneg %p99
        $region18: #{vit_preprocessor.1} parent=11 // pred_check_branch
          %147 = sbr.rel (%p145) target = $region20
        $region19: #{vit_preprocessor.1} parent=11 // pred_region
          %s148 = smul.u32 2, %s21
          %p149 = scmp.lt.s32.totalorder %s148, 1
          %s150 = scalar_select %p149, %s148, 1
          %s151 = smul.addr %s150, 8
          %s152 = scalar_lea.vmem %s2, %s151
          %s153 = smul.u32 2, %s21
        $region20: #{vit_preprocessor.1} parent=11 // pred_fallthru
          _
      $region12: #{vit_preprocessor.1} parent=5 // pred_fallthru
        _
      %p154 = scmp.lt.s32.totalorder %s12, 2
      // Predicated region
      $region21: #{vit_preprocessor.1} parent=5 // pred_check
        %p155 = pneg %p154
      $region22: #{vit_preprocessor.1} parent=5 // pred_check_branch
        %157 = sbr.rel (%p155) target = $region24
      $region23: #{vit_preprocessor.1} parent=5 // pred_region
        // Predicated region
        $region25: #{vit_preprocessor.1} parent=23 // pred_check
          %p158 = pneg %p46
        $region26: #{vit_preprocessor.1} parent=23 // pred_check_branch
          %160 = sbr.rel (%p158) target = $region28
        $region27: #{vit_preprocessor.1} parent=23 // pred_region
          %s161 = sadd.s32 %s20, %s19
          %s162 = smul.u32 2, %s161
          %p163 = scmp.lt.s32.totalorder %s162, 3
          %s164 = scalar_select %p163, %s162, 3
          %s165 = smul.addr %s164, 4
          %s166 = scalar_lea.vmem %s0, %s165
          %s167 = sadd.s32 %s20, %s19
          %s168 = smul.u32 2, %s167
        $region28: #{vit_preprocessor.1} parent=23 // pred_fallthru
          _
      $region24: #{vit_preprocessor.1} parent=5 // pred_fallthru
        _
      %p169 = scmp.le.s32.totalorder 1, %s12
      %p170 = scmp.lt.s32.totalorder %s12, 3
      %p171 = pnand %p169, %p170
      %p172 = pneg %p171
      // Predicated region
      $region29: #{vit_preprocessor.1} parent=5 // pred_check
        _
      $region30: #{vit_preprocessor.1} parent=5 // pred_check_branch
        %174 = sbr.rel (%p171) target = $region32
      $region31: #{vit_preprocessor.1} parent=5 // pred_region
        %s175 = ssub.s32 %s12, 1
        %s176 = sadd.s32 %s22, %s21
        %s177 = smul.u32 2, %s176
        %p178 = scmp.lt.s32.totalorder %s177, 3
        %s179 = scalar_select %p178, %s177, 3
        %s180 = smul.addr %s179, 4
        %s181 = scalar_lea.vmem %s0, %s180
        %p182 = pneg %p52
        %p183 = pneg %p49
        %p184 = pneg %p73
        %p185 = pneg %p70
        %s186 = smul.u32 2, %s21
        %p187 = scmp.lt.s32.totalorder %s186, 1
        %s188 = scalar_select %p187, %s186, 1
        %s189 = smul.addr %s188, 8
        %s190 = scalar_lea.vmem %s2, %s189
        %p191 = pneg %p99
        %p192 = pneg %p96
        %p193 = pneg %p127
        %p194 = pneg %p124
        %s195 = sand.u32 %s114, 1
        %s196 = scalar_lea.sflag [#allocation3], %s195
        %s197 = sand.u32 %s114, 1
        %s198 = smul.addr %s197, 16
        %s199 = scalar_lea.vmem [#allocation2], %s198
        %s200 = sadd.s32 %s22, %s21
        %s201 = smul.u32 2, %s200
        %p202 = scmp.lt.s32.totalorder %s201, 3
        %s203 = scalar_select %p202, %s201, 3
        %s204 = smul.addr %s203, 4
        %s205 = scalar_lea.vmem %s0, %s204
        %s206 = sadd.s32 %s22, %s21
        %s207 = smul.u32 2, %s206
        %s208 = smul.u32 2, %s21
        %p209 = scmp.lt.s32.totalorder %s208, 1
        %s210 = scalar_select %p209, %s208, 1
        %s211 = smul.addr %s210, 8
        %s212 = scalar_lea.vmem %s2, %s211
        %s213 = smul.u32 2, %s21
        %s214 = sadd.s32 %s22, %s21
        %s215 = smul.u32 2, %s214
        %v216 = vld [vmem:[%s205] sm:$0xf]
        %v217 = vld [vmem:[%s205 + $0x4] sm:$0xf]
        %v218 = vld [vmem:[%s1] sm:$0xf]
        %v219 = vld [vmem:[%s1 + $0x4] sm:$0xf]
        %v220 = vld [vmem:[%s1 + $0x8] sm:$0xf]
        %v221 = vld [vmem:[%s1 + $0xc] sm:$0xf]
        %v222 = vld [vmem:[%s1 + $0x10] sm:$0xf]
        %v223 = vld [vmem:[%s1 + $0x14] sm:$0xf]
        %v224 = vld [vmem:[%s1 + $0x18] sm:$0xf]
        %v225 = vld [vmem:[%s1 + $0x1c] sm:$0xf]
        %v226 = vld [vmem:[%s1 + $0x20] sm:$0xf]
        %v227 = vld [vmem:[%s1 + $0x24] sm:$0xf]
        %v228 = vld [vmem:[%s1 + $0x28] sm:$0xf]
        %v229 = vld [vmem:[%s1 + $0x2c] sm:$0xf]
        %v230 = vld [vmem:[%s1 + $0x30] sm:$0xf]
        %v231 = vld [vmem:[%s1 + $0x34] sm:$0xf]
        %v232 = vld [vmem:[%s1 + $0x38] sm:$0xf]
        %v233 = vld [vmem:[%s1 + $0x3c] sm:$0xf]
        %v234 = vld [vmem:[%s212] sm:$0xff]
        %v235 = vld [vmem:[%s212 + $0x8] sm:$0xff]
        %v238 = vunpack.c.l.b16 %v216
        %v239 = vunpack.c.l.b16 %v217
        %v240 = vpack.c.b16 %v239, %v238
        %v258 = vunpack.c.l.b16 %v218
        %v259 = vunpack.c.l.b16 %v219
        %v260 = vunpack.c.l.b16 %v220
        %v261 = vunpack.c.l.b16 %v221
        %v262 = vunpack.c.l.b16 %v222
        %v263 = vunpack.c.l.b16 %v223
        %v264 = vunpack.c.l.b16 %v224
        %v265 = vunpack.c.l.b16 %v225
        %v266 = vunpack.c.l.b16 %v226
        %v267 = vunpack.c.l.b16 %v227
        %v268 = vunpack.c.l.b16 %v228
        %v269 = vunpack.c.l.b16 %v229
        %v270 = vunpack.c.l.b16 %v230
        %v271 = vunpack.c.l.b16 %v231
        %v272 = vunpack.c.l.b16 %v232
        %v273 = vunpack.c.l.b16 %v233
        %v274 = vpack.c.b16 %v259, %v258
        %v275 = vpack.c.b16 %v261, %v260
        %v276 = vpack.c.b16 %v263, %v262
        %v277 = vpack.c.b16 %v265, %v264
        %v278 = vpack.c.b16 %v267, %v266
        %v279 = vpack.c.b16 %v269, %v268
        %v280 = vpack.c.b16 %v271, %v270
        %v281 = vpack.c.b16 %v273, %v272
        %290 = vmatpush.bf16.msra.mxu0 %v281
        %291 = vmatpush.bf16.msra.mxu0 %v280
        %292 = vmatpush.bf16.msra.mxu0 %v279
        %293 = vmatpush.bf16.msra.mxu0 %v278
        %294 = vmatpush.bf16.msra.mxu0 %v277
        %295 = vmatpush.bf16.msra.mxu0 %v276
        %296 = vmatpush.bf16.msra.mxu0 %v275
        %297 = vmatpush.bf16.msra.mxu0 %v274
        %298 = vmatmul.bf16.gmra.mxu0 %v240
        %v299 = vpop.f32.mrf.mxu0
        %v300 = vadd.f32 %v234, %v299
        %v301 = vpop.f32.mrf.mxu0
        %v302 = vadd.f32 %v235, %v301
        %303 = vdwg.mxu0
        %vm304 = vcmask 261120
        %305 = vst.msk [vmem:[%s199] sm:$0xff] %vm304, %v300
        %306 = vst.msk [vmem:[%s199 + $0x8] sm:$0xff] %vm304, %v302
        %s307 = sand.u32 %s114, 1
        %s308 = scalar_lea.sflag [#allocation3], %s307
        %s309 = sand.u32 %s114, 1
        %s310 = smul.addr %s309, 16
        %s311 = scalar_lea.vmem [#allocation2], %s310
        // Predicated region
        $region33: #{vit_preprocessor.1} parent=31 // pred_check
          %p312 = pneg %p124
        $region34: #{vit_preprocessor.1} parent=31 // pred_check_branch
          %314 = sbr.rel (%p312) target = $region36
        $region35: #{vit_preprocessor.1} parent=31 // pred_region
          %s315 = sadd.s32 %s22, %s21
          %s316 = smul.u32 2, %s315
          %318 = vsyncadd %s308, 0
          %s319 = smul.addr %s316, 8
          %s320 = scalar_lea.hbm %s3, %s319
          %s321 = sshll.u32 %s311, 4
          %s322 = int_to_ptr.vmem [resolvable:$true] %s321
          %s323 = sshll.u32 %s320, 4
          %s324 = int_to_ptr.hbm [resolvable:$true] %s323
          %329 = dma.vmem_to_hbm [thread:$0]  %s322, 256, %s324, %s308, 128, 128, 8
        $region36: #{vit_preprocessor.1} parent=31 // pred_fallthru
          _
      $region32: #{vit_preprocessor.1} parent=5 // pred_fallthru
        _
      %p330 = scmp.le.s32.totalorder 2, %s12
      // Predicated region
      $region37: #{vit_preprocessor.1} parent=5 // pred_check
        %p331 = pneg %p330
      $region38: #{vit_preprocessor.1} parent=5 // pred_check_branch
        %333 = sbr.rel (%p331) target = $region40
      $region39: #{vit_preprocessor.1} parent=5 // pred_region
        %s334 = ssub.s32 %s12, 2
        // Predicated region
        $region41: #{vit_preprocessor.1} parent=39 // pred_check
          %p335 = pneg %p130
        $region42: #{vit_preprocessor.1} parent=39 // pred_check_branch
          %337 = sbr.rel (%p335) target = $region44
        $region43: #{vit_preprocessor.1} parent=39 // pred_region
          %s338 = sand.u32 %s115, 1
          %s339 = scalar_lea.sflag [#allocation3], %s338
          %s340 = sand.u32 %s115, 1
          %s341 = smul.addr %s340, 16
          %s342 = scalar_lea.vmem [#allocation2], %s341
          %344 = dma.done %s339, 256
        $region44: #{vit_preprocessor.1} parent=39 // pred_fallthru
          _
      $region40: #{vit_preprocessor.1} parent=5 // pred_fallthru
        _
    $region6: #{vit_preprocessor.1} parent=1 // loop_footer
      %s16 = sadd.s32 1, %s12
    $region7: #{vit_preprocessor.1} parent=1 // loop_footer_branch
      %11 = sbr.rel target = $region3
    $region8: #{vit_preprocessor.1} parent=1 // loop_exit
      _
    %345 = vsyncpa [#allocation3], 1
    %s346 = scalar_lea.sflag [#allocation3], 1
    %347 = vsyncpa %s346, 1

</llo_original>
